<compile_context>
chip_gen: v7x
topology: tpu7x:2x2x1
jax: 0.10.0
libtpu: 0.0.40
codegen_flags: <defaults>
</compile_context>

<pallas_src>
import jax
import jax.numpy as jnp
from jax import lax
from jax.experimental import pallas as pl
from jax.experimental.pallas import tpu as pltpu


def _embed_kernel(seq_ref, item_ref, pos_ref, out_ref):
    # seq_ref : SMEM (B, L) int32    -- scalar-prefetched item indices
    # item_ref: VMEM (N, E) f32      -- full item-embedding table (grid invariant)
    # pos_ref : VMEM (1, L*E) f32    -- position embedding, pre-flattened lane-dense
    # out_ref : VMEM (TB, L*E) f32   -- lane-dense output block for TB batch rows
    n_items, emb = item_ref.shape
    seq_len = pos_ref.shape[1] // emb
    tb_rows = out_ref.shape[0]

    base = pl.program_id(0) * tb_rows

    # Hoist the (grid- and row-invariant) positional slices out of the row loop.
    pos_pieces = [pos_ref[pl.ds(0, 1), pl.ds(l * emb, emb)] for l in range(seq_len)]

    def gather_one_batch_row(tb, carry):
        # For batch row (base + tb): gather L embedding rows from the VMEM table
        # using SMEM scalar indices, fuse the positional add, and write them into
        # the lane-dense output block at static lane offsets.
        for l in range(seq_len):  # L is small and static: unrolled
            idx = seq_ref[base + tb, l]
            # Clamp (PyTorch would raise on out-of-range ids).
            idx = jnp.minimum(jnp.maximum(idx, 0), n_items - 1)
            row = item_ref[pl.ds(idx, 1), :]                      # (1, E) dynamic row load
            out_ref[pl.ds(tb, 1), pl.ds(l * emb, emb)] = (
                row + pos_pieces[l]
            ).astype(out_ref.dtype)
        return carry

    lax.fori_loop(0, tb_rows, gather_one_batch_row, 0, unroll=tb_rows <= 8)


def _choose_batch_block(batch):
    # Block sublane dim must be a multiple of 8 or equal the full batch dim.
    for tb in (64, 32, 16, 8):
        if batch % tb == 0:
            return tb
    return batch  # small / odd batches: one block covers the whole batch


def transformer_embed(batch_seqs, item_emb, pos_emb):
    """x = item_emb[batch_seqs] + pos_emb ; dropout == identity (eval mode)."""
    B, L = batch_seqs.shape
    N, E = item_emb.shape
    assert pos_emb.shape == (L, E)

    TB = _choose_batch_block(B)
    grid = (B // TB,)

    seq_i32 = batch_seqs.astype(jnp.int32)
    pos_flat = pos_emb.reshape(1, L * E)  # lane-dense, grid-invariant

    out2d = pl.pallas_call(
        _embed_kernel,
        out_shape=jax.ShapeDtypeStruct((B, L * E), item_emb.dtype),
        grid_spec=pltpu.PrefetchScalarGridSpec(
            num_scalar_prefetch=1,  # batch_seqs -> SMEM, drives the gather
            grid=grid,
            in_specs=[
                # Full item table resident in VMEM (small-table fast path).
                pl.BlockSpec((N, E), lambda i, seq: (0, 0)),
                # Position embedding, flattened lane-dense, grid-invariant.
                pl.BlockSpec((1, L * E), lambda i, seq: (0, 0)),
            ],
            out_specs=pl.BlockSpec((TB, L * E), lambda i, seq: (i, 0)),
        ),
        compiler_params=pltpu.CompilerParams(
            dimension_semantics=("parallel",),  # batch blocks are independent
            vmem_limit_bytes=32 * 1024 * 1024,
        ),
    )(seq_i32, item_emb, pos_flat)

    return out2d.reshape(B, L, E)


if __name__ == "__main__":
    # Small shapes consistent with the module's forward.
    item_num = 64
    emb_size = 32
    max_len = 8
    batch = 2

    key = jax.random.PRNGKey(0)
    k_items, k_pos, k_seq = jax.random.split(key, 3)

    # Deterministic parameter init mirroring _init_weights: Embedding ~ N(0, 0.02)
    item_emb = 0.02 * jax.random.normal(k_items, (item_num, emb_size), dtype=jnp.float32)
    pos_emb = 0.02 * jax.random.normal(k_pos, (max_len, emb_size), dtype=jnp.float32)

    batch_seqs = jax.random.randint(k_seq, (batch, max_len), 0, item_num, dtype=jnp.int32)

    out = transformer_embed(batch_seqs, item_emb, pos_emb)
    out = jax.block_until_ready(out)

    # Pure-JAX reference (dropout == identity in eval mode).
    ref = item_emb[batch_seqs] + pos_emb[None, :, :]
    assert out.shape == (batch, max_len, emb_size)
    assert jnp.allclose(out, ref, atol=1e-6, rtol=1e-6)

    print("KERNEL_OK")
</pallas_src>

<mosaic_0001>
module attributes {stable_mosaic.version = 11 : i64} {
  func.func @_embed_kernel(%arg0: i32, %arg1: memref<2x8xi32, #tpu.memory_space<smem>>, %arg2: memref<64x32xf32, #tpu.memory_space<vmem>>, %arg3: memref<1x256xf32, #tpu.memory_space<vmem>>, %arg4: memref<2x256xf32, #tpu.memory_space<vmem>>) attributes {dimension_semantics = [#tpu.dimension_semantics<parallel>], iteration_bounds = array<i64: 1>, scalar_prefetch = 1 : i64, scratch_operands = 0 : i64, tpu.core_type = #tpu.core_type<tc>, window_params = [{pipeline_mode = #tpu.pipeline_mode<synchronous>, transform_indices = @transform_0, window_bounds = array<i64: 64, 32>}, {pipeline_mode = #tpu.pipeline_mode<synchronous>, transform_indices = @transform_1, window_bounds = array<i64: 1, 256>}, {transform_indices = @transform_2, window_bounds = array<i64: 2, 256>}]} {
    %c2_i32 = arith.constant 2 : i32
    %0 = arith.muli %arg0, %c2_i32 : i32
    %c0 = arith.constant 0 : index
    %c0_0 = arith.constant 0 : index
    %1 = vector.load %arg3[%c0, %c0_0] : memref<1x256xf32, #tpu.memory_space<vmem>>, vector<1x32xf32>
    %c0_1 = arith.constant 0 : index
    %c32 = arith.constant 32 : index
    %2 = vector.load %arg3[%c0_1, %c32] : memref<1x256xf32, #tpu.memory_space<vmem>>, vector<1x32xf32>
    %c0_2 = arith.constant 0 : index
    %c64 = arith.constant 64 : index
    %3 = vector.load %arg3[%c0_2, %c64] : memref<1x256xf32, #tpu.memory_space<vmem>>, vector<1x32xf32>
    %c0_3 = arith.constant 0 : index
    %c96 = arith.constant 96 : index
    %4 = vector.load %arg3[%c0_3, %c96] : memref<1x256xf32, #tpu.memory_space<vmem>>, vector<1x32xf32>
    %c0_4 = arith.constant 0 : index
    %c128 = arith.constant 128 : index
    %5 = vector.load %arg3[%c0_4, %c128] : memref<1x256xf32, #tpu.memory_space<vmem>>, vector<1x32xf32>
    %c0_5 = arith.constant 0 : index
    %c160 = arith.constant 160 : index
    %6 = vector.load %arg3[%c0_5, %c160] : memref<1x256xf32, #tpu.memory_space<vmem>>, vector<1x32xf32>
    %c0_6 = arith.constant 0 : index
    %c192 = arith.constant 192 : index
    %7 = vector.load %arg3[%c0_6, %c192] : memref<1x256xf32, #tpu.memory_space<vmem>>, vector<1x32xf32>
    %c0_7 = arith.constant 0 : index
    %c224 = arith.constant 224 : index
    %8 = vector.load %arg3[%c0_7, %c224] : memref<1x256xf32, #tpu.memory_space<vmem>>, vector<1x32xf32>
    %c0_i32 = arith.constant 0 : i32
    %9 = arith.addi %0, %c0_i32 : i32
    %10 = arith.index_cast %9 : i32 to index
    %c0_8 = arith.constant 0 : index
    %11 = memref.load %arg1[%10, %c0_8] : memref<2x8xi32, #tpu.memory_space<smem>>
    %c0_i32_9 = arith.constant 0 : i32
    %12 = arith.maxsi %11, %c0_i32_9 : i32
    %c63_i32 = arith.constant 63 : i32
    %13 = arith.minsi %12, %c63_i32 : i32
    %14 = arith.index_cast %13 : i32 to index
    %c0_10 = arith.constant 0 : index
    %15 = vector.load %arg2[%14, %c0_10] : memref<64x32xf32, #tpu.memory_space<vmem>>, vector<1x32xf32>
    %16 = arith.addf %15, %1 : vector<1x32xf32>
    %17 = arith.index_cast %c0_i32 : i32 to index
    %c0_11 = arith.constant 0 : index
    %18 = vector.load %arg4[%17, %c0_11] : memref<2x256xf32, #tpu.memory_space<vmem>>, vector<1x32xf32>
    tpu.vector_store %arg4[%17, %c0_11], %16 {strides = array<i32>} : memref<2x256xf32, #tpu.memory_space<vmem>>, vector<1x32xf32>,
    %19 = arith.addi %0, %c0_i32 : i32
    %20 = arith.index_cast %19 : i32 to index
    %c1 = arith.constant 1 : index
    %21 = memref.load %arg1[%20, %c1] : memref<2x8xi32, #tpu.memory_space<smem>>
    %c0_i32_12 = arith.constant 0 : i32
    %22 = arith.maxsi %21, %c0_i32_12 : i32
    %c63_i32_13 = arith.constant 63 : i32
    %23 = arith.minsi %22, %c63_i32_13 : i32
    %24 = arith.index_cast %23 : i32 to index
    %c0_14 = arith.constant 0 : index
    %25 = vector.load %arg2[%24, %c0_14] : memref<64x32xf32, #tpu.memory_space<vmem>>, vector<1x32xf32>
    %26 = arith.addf %25, %2 : vector<1x32xf32>
    %27 = arith.index_cast %c0_i32 : i32 to index
    %c32_15 = arith.constant 32 : index
    %28 = vector.load %arg4[%27, %c32_15] : memref<2x256xf32, #tpu.memory_space<vmem>>, vector<1x32xf32>
    tpu.vector_store %arg4[%27, %c32_15], %26 {strides = array<i32>} : memref<2x256xf32, #tpu.memory_space<vmem>>, vector<1x32xf32>,
    %29 = arith.addi %0, %c0_i32 : i32
    %30 = arith.index_cast %29 : i32 to index
    %c2 = arith.constant 2 : index
    %31 = memref.load %arg1[%30, %c2] : memref<2x8xi32, #tpu.memory_space<smem>>
    %c0_i32_16 = arith.constant 0 : i32
    %32 = arith.maxsi %31, %c0_i32_16 : i32
    %c63_i32_17 = arith.constant 63 : i32
    %33 = arith.minsi %32, %c63_i32_17 : i32
    %34 = arith.index_cast %33 : i32 to index
    %c0_18 = arith.constant 0 : index
    %35 = vector.load %arg2[%34, %c0_18] : memref<64x32xf32, #tpu.memory_space<vmem>>, vector<1x32xf32>
    %36 = arith.addf %35, %3 : vector<1x32xf32>
    %37 = arith.index_cast %c0_i32 : i32 to index
    %c64_19 = arith.constant 64 : index
    %38 = vector.load %arg4[%37, %c64_19] : memref<2x256xf32, #tpu.memory_space<vmem>>, vector<1x32xf32>
    tpu.vector_store %arg4[%37, %c64_19], %36 {strides = array<i32>} : memref<2x256xf32, #tpu.memory_space<vmem>>, vector<1x32xf32>,
    %39 = arith.addi %0, %c0_i32 : i32
    %40 = arith.index_cast %39 : i32 to index
    %c3 = arith.constant 3 : index
    %41 = memref.load %arg1[%40, %c3] : memref<2x8xi32, #tpu.memory_space<smem>>
    %c0_i32_20 = arith.constant 0 : i32
    %42 = arith.maxsi %41, %c0_i32_20 : i32
    %c63_i32_21 = arith.constant 63 : i32
    %43 = arith.minsi %42, %c63_i32_21 : i32
    %44 = arith.index_cast %43 : i32 to index
    %c0_22 = arith.constant 0 : index
    %45 = vector.load %arg2[%44, %c0_22] : memref<64x32xf32, #tpu.memory_space<vmem>>, vector<1x32xf32>
    %46 = arith.addf %45, %4 : vector<1x32xf32>
    %47 = arith.index_cast %c0_i32 : i32 to index
    %c96_23 = arith.constant 96 : index
    %48 = vector.load %arg4[%47, %c96_23] : memref<2x256xf32, #tpu.memory_space<vmem>>, vector<1x32xf32>
    tpu.vector_store %arg4[%47, %c96_23], %46 {strides = array<i32>} : memref<2x256xf32, #tpu.memory_space<vmem>>, vector<1x32xf32>,
    %49 = arith.addi %0, %c0_i32 : i32
    %50 = arith.index_cast %49 : i32 to index
    %c4 = arith.constant 4 : index
    %51 = memref.load %arg1[%50, %c4] : memref<2x8xi32, #tpu.memory_space<smem>>
    %c0_i32_24 = arith.constant 0 : i32
    %52 = arith.maxsi %51, %c0_i32_24 : i32
    %c63_i32_25 = arith.constant 63 : i32
    %53 = arith.minsi %52, %c63_i32_25 : i32
    %54 = arith.index_cast %53 : i32 to index
    %c0_26 = arith.constant 0 : index
    %55 = vector.load %arg2[%54, %c0_26] : memref<64x32xf32, #tpu.memory_space<vmem>>, vector<1x32xf32>
    %56 = arith.addf %55, %5 : vector<1x32xf32>
    %57 = arith.index_cast %c0_i32 : i32 to index
    %c128_27 = arith.constant 128 : index
    %58 = vector.load %arg4[%57, %c128_27] : memref<2x256xf32, #tpu.memory_space<vmem>>, vector<1x32xf32>
    tpu.vector_store %arg4[%57, %c128_27], %56 {strides = array<i32>} : memref<2x256xf32, #tpu.memory_space<vmem>>, vector<1x32xf32>,
    %59 = arith.addi %0, %c0_i32 : i32
    %60 = arith.index_cast %59 : i32 to index
    %c5 = arith.constant 5 : index
    %61 = memref.load %arg1[%60, %c5] : memref<2x8xi32, #tpu.memory_space<smem>>
    %c0_i32_28 = arith.constant 0 : i32
    %62 = arith.maxsi %61, %c0_i32_28 : i32
    %c63_i32_29 = arith.constant 63 : i32
    %63 = arith.minsi %62, %c63_i32_29 : i32
    %64 = arith.index_cast %63 : i32 to index
    %c0_30 = arith.constant 0 : index
    %65 = vector.load %arg2[%64, %c0_30] : memref<64x32xf32, #tpu.memory_space<vmem>>, vector<1x32xf32>
    %66 = arith.addf %65, %6 : vector<1x32xf32>
    %67 = arith.index_cast %c0_i32 : i32 to index
    %c160_31 = arith.constant 160 : index
    %68 = vector.load %arg4[%67, %c160_31] : memref<2x256xf32, #tpu.memory_space<vmem>>, vector<1x32xf32>
    tpu.vector_store %arg4[%67, %c160_31], %66 {strides = array<i32>} : memref<2x256xf32, #tpu.memory_space<vmem>>, vector<1x32xf32>,
    %69 = arith.addi %0, %c0_i32 : i32
    %70 = arith.index_cast %69 : i32 to index
    %c6 = arith.constant 6 : index
    %71 = memref.load %arg1[%70, %c6] : memref<2x8xi32, #tpu.memory_space<smem>>
    %c0_i32_32 = arith.constant 0 : i32
    %72 = arith.maxsi %71, %c0_i32_32 : i32
    %c63_i32_33 = arith.constant 63 : i32
    %73 = arith.minsi %72, %c63_i32_33 : i32
    %74 = arith.index_cast %73 : i32 to index
    %c0_34 = arith.constant 0 : index
    %75 = vector.load %arg2[%74, %c0_34] : memref<64x32xf32, #tpu.memory_space<vmem>>, vector<1x32xf32>
    %76 = arith.addf %75, %7 : vector<1x32xf32>
    %77 = arith.index_cast %c0_i32 : i32 to index
    %c192_35 = arith.constant 192 : index
    %78 = vector.load %arg4[%77, %c192_35] : memref<2x256xf32, #tpu.memory_space<vmem>>, vector<1x32xf32>
    tpu.vector_store %arg4[%77, %c192_35], %76 {strides = array<i32>} : memref<2x256xf32, #tpu.memory_space<vmem>>, vector<1x32xf32>,
    %79 = arith.addi %0, %c0_i32 : i32
    %80 = arith.index_cast %79 : i32 to index
    %c7 = arith.constant 7 : index
    %81 = memref.load %arg1[%80, %c7] : memref<2x8xi32, #tpu.memory_space<smem>>
    %c0_i32_36 = arith.constant 0 : i32
    %82 = arith.maxsi %81, %c0_i32_36 : i32
    %c63_i32_37 = arith.constant 63 : i32
    %83 = arith.minsi %82, %c63_i32_37 : i32
    %84 = arith.index_cast %83 : i32 to index
    %c0_38 = arith.constant 0 : index
    %85 = vector.load %arg2[%84, %c0_38] : memref<64x32xf32, #tpu.memory_space<vmem>>, vector<1x32xf32>
    %86 = arith.addf %85, %8 : vector<1x32xf32>
    %87 = arith.index_cast %c0_i32 : i32 to index
    %c224_39 = arith.constant 224 : index
    %88 = vector.load %arg4[%87, %c224_39] : memref<2x256xf32, #tpu.memory_space<vmem>>, vector<1x32xf32>
    tpu.vector_store %arg4[%87, %c224_39], %86 {strides = array<i32>} : memref<2x256xf32, #tpu.memory_space<vmem>>, vector<1x32xf32>,
    %c1_i32 = arith.constant 1 : i32
    %89 = arith.addi %0, %c1_i32 : i32
    %90 = arith.index_cast %89 : i32 to index
    %c0_40 = arith.constant 0 : index
    %91 = memref.load %arg1[%90, %c0_40] : memref<2x8xi32, #tpu.memory_space<smem>>
    %c0_i32_41 = arith.constant 0 : i32
    %92 = arith.maxsi %91, %c0_i32_41 : i32
    %c63_i32_42 = arith.constant 63 : i32
    %93 = arith.minsi %92, %c63_i32_42 : i32
    %94 = arith.index_cast %93 : i32 to index
    %c0_43 = arith.constant 0 : index
    %95 = vector.load %arg2[%94, %c0_43] : memref<64x32xf32, #tpu.memory_space<vmem>>, vector<1x32xf32>
    %96 = arith.addf %95, %1 : vector<1x32xf32>
    %97 = arith.index_cast %c1_i32 : i32 to index
    %c0_44 = arith.constant 0 : index
    %98 = vector.load %arg4[%97, %c0_44] : memref<2x256xf32, #tpu.memory_space<vmem>>, vector<1x32xf32>
    tpu.vector_store %arg4[%97, %c0_44], %96 {strides = array<i32>} : memref<2x256xf32, #tpu.memory_space<vmem>>, vector<1x32xf32>,
    %99 = arith.addi %0, %c1_i32 : i32
    %100 = arith.index_cast %99 : i32 to index
    %c1_45 = arith.constant 1 : index
    %101 = memref.load %arg1[%100, %c1_45] : memref<2x8xi32, #tpu.memory_space<smem>>
    %c0_i32_46 = arith.constant 0 : i32
    %102 = arith.maxsi %101, %c0_i32_46 : i32
    %c63_i32_47 = arith.constant 63 : i32
    %103 = arith.minsi %102, %c63_i32_47 : i32
    %104 = arith.index_cast %103 : i32 to index
    %c0_48 = arith.constant 0 : index
    %105 = vector.load %arg2[%104, %c0_48] : memref<64x32xf32, #tpu.memory_space<vmem>>, vector<1x32xf32>
    %106 = arith.addf %105, %2 : vector<1x32xf32>
    %107 = arith.index_cast %c1_i32 : i32 to index
    %c32_49 = arith.constant 32 : index
    %108 = vector.load %arg4[%107, %c32_49] : memref<2x256xf32, #tpu.memory_space<vmem>>, vector<1x32xf32>
    tpu.vector_store %arg4[%107, %c32_49], %106 {strides = array<i32>} : memref<2x256xf32, #tpu.memory_space<vmem>>, vector<1x32xf32>,
    %109 = arith.addi %0, %c1_i32 : i32
    %110 = arith.index_cast %109 : i32 to index
    %c2_50 = arith.constant 2 : index
    %111 = memref.load %arg1[%110, %c2_50] : memref<2x8xi32, #tpu.memory_space<smem>>
    %c0_i32_51 = arith.constant 0 : i32
    %112 = arith.maxsi %111, %c0_i32_51 : i32
    %c63_i32_52 = arith.constant 63 : i32
    %113 = arith.minsi %112, %c63_i32_52 : i32
    %114 = arith.index_cast %113 : i32 to index
    %c0_53 = arith.constant 0 : index
    %115 = vector.load %arg2[%114, %c0_53] : memref<64x32xf32, #tpu.memory_space<vmem>>, vector<1x32xf32>
    %116 = arith.addf %115, %3 : vector<1x32xf32>
    %117 = arith.index_cast %c1_i32 : i32 to index
    %c64_54 = arith.constant 64 : index
    %118 = vector.load %arg4[%117, %c64_54] : memref<2x256xf32, #tpu.memory_space<vmem>>, vector<1x32xf32>
    tpu.vector_store %arg4[%117, %c64_54], %116 {strides = array<i32>} : memref<2x256xf32, #tpu.memory_space<vmem>>, vector<1x32xf32>,
    %119 = arith.addi %0, %c1_i32 : i32
    %120 = arith.index_cast %119 : i32 to index
    %c3_55 = arith.constant 3 : index
    %121 = memref.load %arg1[%120, %c3_55] : memref<2x8xi32, #tpu.memory_space<smem>>
    %c0_i32_56 = arith.constant 0 : i32
    %122 = arith.maxsi %121, %c0_i32_56 : i32
    %c63_i32_57 = arith.constant 63 : i32
    %123 = arith.minsi %122, %c63_i32_57 : i32
    %124 = arith.index_cast %123 : i32 to index
    %c0_58 = arith.constant 0 : index
    %125 = vector.load %arg2[%124, %c0_58] : memref<64x32xf32, #tpu.memory_space<vmem>>, vector<1x32xf32>
    %126 = arith.addf %125, %4 : vector<1x32xf32>
    %127 = arith.index_cast %c1_i32 : i32 to index
    %c96_59 = arith.constant 96 : index
    %128 = vector.load %arg4[%127, %c96_59] : memref<2x256xf32, #tpu.memory_space<vmem>>, vector<1x32xf32>
    tpu.vector_store %arg4[%127, %c96_59], %126 {strides = array<i32>} : memref<2x256xf32, #tpu.memory_space<vmem>>, vector<1x32xf32>,
    %129 = arith.addi %0, %c1_i32 : i32
    %130 = arith.index_cast %129 : i32 to index
    %c4_60 = arith.constant 4 : index
    %131 = memref.load %arg1[%130, %c4_60] : memref<2x8xi32, #tpu.memory_space<smem>>
    %c0_i32_61 = arith.constant 0 : i32
    %132 = arith.maxsi %131, %c0_i32_61 : i32
    %c63_i32_62 = arith.constant 63 : i32
    %133 = arith.minsi %132, %c63_i32_62 : i32
    %134 = arith.index_cast %133 : i32 to index
    %c0_63 = arith.constant 0 : index
    %135 = vector.load %arg2[%134, %c0_63] : memref<64x32xf32, #tpu.memory_space<vmem>>, vector<1x32xf32>
    %136 = arith.addf %135, %5 : vector<1x32xf32>
    %137 = arith.index_cast %c1_i32 : i32 to index
    %c128_64 = arith.constant 128 : index
    %138 = vector.load %arg4[%137, %c128_64] : memref<2x256xf32, #tpu.memory_space<vmem>>, vector<1x32xf32>
    tpu.vector_store %arg4[%137, %c128_64], %136 {strides = array<i32>} : memref<2x256xf32, #tpu.memory_space<vmem>>, vector<1x32xf32>,
    %139 = arith.addi %0, %c1_i32 : i32
    %140 = arith.index_cast %139 : i32 to index
    %c5_65 = arith.constant 5 : index
    %141 = memref.load %arg1[%140, %c5_65] : memref<2x8xi32, #tpu.memory_space<smem>>
    %c0_i32_66 = arith.constant 0 : i32
    %142 = arith.maxsi %141, %c0_i32_66 : i32
    %c63_i32_67 = arith.constant 63 : i32
    %143 = arith.minsi %142, %c63_i32_67 : i32
    %144 = arith.index_cast %143 : i32 to index
    %c0_68 = arith.constant 0 : index
    %145 = vector.load %arg2[%144, %c0_68] : memref<64x32xf32, #tpu.memory_space<vmem>>, vector<1x32xf32>
    %146 = arith.addf %145, %6 : vector<1x32xf32>
    %147 = arith.index_cast %c1_i32 : i32 to index
    %c160_69 = arith.constant 160 : index
    %148 = vector.load %arg4[%147, %c160_69] : memref<2x256xf32, #tpu.memory_space<vmem>>, vector<1x32xf32>
    tpu.vector_store %arg4[%147, %c160_69], %146 {strides = array<i32>} : memref<2x256xf32, #tpu.memory_space<vmem>>, vector<1x32xf32>,
    %149 = arith.addi %0, %c1_i32 : i32
    %150 = arith.index_cast %149 : i32 to index
    %c6_70 = arith.constant 6 : index
    %151 = memref.load %arg1[%150, %c6_70] : memref<2x8xi32, #tpu.memory_space<smem>>
    %c0_i32_71 = arith.constant 0 : i32
    %152 = arith.maxsi %151, %c0_i32_71 : i32
    %c63_i32_72 = arith.constant 63 : i32
    %153 = arith.minsi %152, %c63_i32_72 : i32
    %154 = arith.index_cast %153 : i32 to index
    %c0_73 = arith.constant 0 : index
    %155 = vector.load %arg2[%154, %c0_73] : memref<64x32xf32, #tpu.memory_space<vmem>>, vector<1x32xf32>
    %156 = arith.addf %155, %7 : vector<1x32xf32>
    %157 = arith.index_cast %c1_i32 : i32 to index
    %c192_74 = arith.constant 192 : index
    %158 = vector.load %arg4[%157, %c192_74] : memref<2x256xf32, #tpu.memory_space<vmem>>, vector<1x32xf32>
    tpu.vector_store %arg4[%157, %c192_74], %156 {strides = array<i32>} : memref<2x256xf32, #tpu.memory_space<vmem>>, vector<1x32xf32>,
    %159 = arith.addi %0, %c1_i32 : i32
    %160 = arith.index_cast %159 : i32 to index
    %c7_75 = arith.constant 7 : index
    %161 = memref.load %arg1[%160, %c7_75] : memref<2x8xi32, #tpu.memory_space<smem>>
    %c0_i32_76 = arith.constant 0 : i32
    %162 = arith.maxsi %161, %c0_i32_76 : i32
    %c63_i32_77 = arith.constant 63 : i32
    %163 = arith.minsi %162, %c63_i32_77 : i32
    %164 = arith.index_cast %163 : i32 to index
    %c0_78 = arith.constant 0 : index
    %165 = vector.load %arg2[%164, %c0_78] : memref<64x32xf32, #tpu.memory_space<vmem>>, vector<1x32xf32>
    %166 = arith.addf %165, %8 : vector<1x32xf32>
    %167 = arith.index_cast %c1_i32 : i32 to index
    %c224_79 = arith.constant 224 : index
    %168 = vector.load %arg4[%167, %c224_79] : memref<2x256xf32, #tpu.memory_space<vmem>>, vector<1x32xf32>
    tpu.vector_store %arg4[%167, %c224_79], %166 {strides = array<i32>} : memref<2x256xf32, #tpu.memory_space<vmem>>, vector<1x32xf32>,
    %c2_i32_80 = arith.constant 2 : i32
    return
  }
  func.func @transform_0(%arg0: i32, %arg1: memref<2x8xi32, #tpu.memory_space<smem>>) -> (i32, i32) {
    %c0_i32 = arith.constant 0 : i32
    %c0_i32_0 = arith.constant 0 : i32
    %c0_i32_1 = arith.constant 0 : i32
    return %c0_i32, %c0_i32_0 : i32, i32
  }
  func.func @transform_1(%arg0: i32, %arg1: memref<2x8xi32, #tpu.memory_space<smem>>) -> (i32, i32) {
    %c0_i32 = arith.constant 0 : i32
    %c0_i32_0 = arith.constant 0 : i32
    %c0_i32_1 = arith.constant 0 : i32
    return %c0_i32, %c0_i32_0 : i32, i32
  }
  func.func @transform_2(%arg0: i32, %arg1: memref<2x8xi32, #tpu.memory_space<smem>>) -> (i32, i32) {
    %c0_i32 = arith.constant 0 : i32
    %c0_i32_0 = arith.constant 0 : i32
    return %arg0, %c0_i32 : i32, i32
  }
}

</mosaic_0001>

<llo_original>
// kernel: tpu_custom_call.1
$region0: #{tpu_custom_call.1}
  #allocation0 [shape = 'u32[]', space=smem, size = 0x4, offset = 0x4, fixed_abs, tag = 'smem constant byte address 0x4 - core index']
  #allocation1 [shape = 'u32[144,128]{1,0:T(1,128)}', space=vmem, size = 0x12000, scoped, tag = 'internal scratch']
  #allocation2 [shape = 's32[1]{0}', space=sflag, size = 0x4, scoped, tag = 'scoped memory for tpu_custom_call.1']
  #allocation3 [shape = 'u8[1024]{0}', space=smem, size = 0x400, scoped, tag = 'prefetched SMEM operand 0']
  %s0 = inlined_call_operand.vmem [shape: s32[2,8], index: 0, kind: input, shape index: {}]
  %s1 = inlined_call_operand.vmem [shape: f32[64,32], index: 1, kind: input, shape index: {}]
  %s2 = inlined_call_operand.vmem [shape: f32[1,256], index: 2, kind: input, shape index: {}]
  %s3 = inlined_call_operand.hbm [shape: f32[2,256], index: 3, kind: output, shape index: {}]
  %s4 = sld [smem:[#allocation0]]
  $region18: #{tpu_custom_call.1} parent=0
    _
  %s6 = ssub.s32 1, %s4
  %s7 = scalar_select 0, %s6, %s4
  %s8 = sshll.u32 %s0, 4
  %s9 = int_to_ptr.vmem [resolvable:$true] %s8
  %11 = dma.vmem_to_smem %s9, 32, [#allocation3], [#allocation2]
  %12 = dma.done [#allocation2], 32
  %13 = sfence
  $region1: #{tpu_custom_call.1} parent=0
    #allocation4 [shape = 'u8[2048]{0}', space=vmem, size = 0x800, scoped, tag = 'output window, operand 0, single buffered']
    #allocation5 [shape = 's32[1]{0}', space=sflag, size = 0x4, scoped, tag = 'scoped memory for tpu_custom_call.1']
    %14 = vsyncpa [#allocation5], 0
    // Predicated region
    $region2: #{tpu_custom_call.1} parent=1 // pred_check
      _
    $region3: #{tpu_custom_call.1} parent=1 // pred_check_branch
      %16 = sbr.rel (0) target = $region5
    $region4: #{tpu_custom_call.1} parent=1 // pred_region
      _
    $region5: #{tpu_custom_call.1} parent=1 // pred_fallthru
      _
    // Predicated region
    $region6: #{tpu_custom_call.1} parent=1 // pred_check
      _
    $region7: #{tpu_custom_call.1} parent=1 // pred_check_branch
      %18 = sbr.rel (0) target = $region9
    $region8: #{tpu_custom_call.1} parent=1 // pred_region
      _
    $region9: #{tpu_custom_call.1} parent=1 // pred_fallthru
      _
    %s19 = smul.u32 0, 2
    %v20 = vld [vmem:[%s2] sm:$0x1]
    %v21 = vld [vmem:[%s2 + $0x1] sm:$0x1]
    %s22 = smul.u32 %s19, 128
    %s23 = sld [smem:[#allocation3 + %s22]]
    %p24 = scmp.gt.s32.totalorder %s23, 0
    %s25 = scalar_select %p24, %s23, 0
    %p26 = scmp.lt.s32.totalorder %s25, 63
    %s27 = scalar_select %p26, %s25, 63
    %s28 = scalar_lea.vmem %s1, %s27
    %v29 = vld [vmem:[%s28] sm:$0x1]
    %v30 = vadd.f32 %v29, %v20
    %vm31 = vcmask 253952
    %32 = vst.msk [vmem:[#allocation4] sm:$0x1] %vm31, %v30
    %s33 = sadd.s32 %s22, 1
    %s34 = sld [smem:[#allocation3 + %s33]]
    %p35 = scmp.gt.s32.totalorder %s34, 0
    %s36 = scalar_select %p35, %s34, 0
    %p37 = scmp.lt.s32.totalorder %s36, 63
    %s38 = scalar_select %p37, %s36, 63
    %s39 = scalar_lea.vmem %s1, %s38
    %v40 = vld [vmem:[%s39] sm:$0x1]
    %v42 = vlaneseq
    %v43 = vshrl.u32 %v42, 7
    %v44 = vsub.s32 0, %v43
    %v45 = vrot.slane %v20, %v44
    %46 = vrot.lane.b32.xlu0 %v45, 96
    %v47 = vpop.permute.xlu0 %46
    %v49 = vadd.f32 %v40, %v47
    %v52 = vunpack.c.l.s4 1983009808
    %v53 = vunpack.c.0.s8 %v52
    %v54 = vlaneseq
    %v55 = vshrl.u32 %v54, 7
    %v56 = vsub.s32 %v53, %v55
    %v57 = vrot.slane %v49, %v56
    %58 = vrot.lane.b32.xlu0 %v57, 32
    %v59 = vpop.permute.xlu0 %58
    %vm61 = vcmask 516352
    %62 = vst.msk [vmem:[#allocation4] sm:$0x1] %vm61, %v59
    %s63 = sadd.s32 %s22, 2
    %s64 = sld [smem:[#allocation3 + %s63]]
    %p65 = scmp.gt.s32.totalorder %s64, 0
    %s66 = scalar_select %p65, %s64, 0
    %p67 = scmp.lt.s32.totalorder %s66, 63
    %s68 = scalar_select %p67, %s66, 63
    %s69 = scalar_lea.vmem %s1, %s68
    %v70 = vld [vmem:[%s69] sm:$0x1]
    %71 = vrot.lane.b32.xlu0 %v45, 64
    %v72 = vpop.permute.xlu0 %71
    %v74 = vadd.f32 %v70, %v72
    %v77 = vunpack.c.l.s4 1983009808
    %v78 = vunpack.c.0.s8 %v77
    %v79 = vlaneseq
    %v80 = vshrl.u32 %v79, 7
    %v81 = vsub.s32 %v78, %v80
    %v82 = vrot.slane %v74, %v81
    %83 = vrot.lane.b32.xlu0 %v82, 64
    %v84 = vpop.permute.xlu0 %83
    %vm86 = vcmask 778752
    %87 = vst.msk [vmem:[#allocation4] sm:$0x1] %vm86, %v84
    %s88 = sadd.s32 %s22, 3
    %s89 = sld [smem:[#allocation3 + %s88]]
    %p90 = scmp.gt.s32.totalorder %s89, 0
    %s91 = scalar_select %p90, %s89, 0
    %p92 = scmp.lt.s32.totalorder %s91, 63
    %s93 = scalar_select %p92, %s91, 63
    %s94 = scalar_lea.vmem %s1, %s93
    %v95 = vld [vmem:[%s94] sm:$0x1]
    %96 = vrot.lane.b32.xlu0 %v45, 32
    %v97 = vpop.permute.xlu0 %96
    %v99 = vadd.f32 %v95, %v97
    %v102 = vunpack.c.l.s4 1983009808
    %v103 = vunpack.c.0.s8 %v102
    %v104 = vlaneseq
    %v105 = vshrl.u32 %v104, 7
    %v106 = vsub.s32 %v103, %v105
    %v107 = vrot.slane %v99, %v106
    %108 = vrot.lane.b32.xlu0 %v107, 96
    %v109 = vpop.permute.xlu0 %108
    %vm111 = vcmask 1041152
    %112 = vst.msk [vmem:[#allocation4] sm:$0x1] %vm111, %v109
    %s113 = sadd.s32 %s22, 4
    %s114 = sld [smem:[#allocation3 + %s113]]
    %p115 = scmp.gt.s32.totalorder %s114, 0
    %s116 = scalar_select %p115, %s114, 0
    %p117 = scmp.lt.s32.totalorder %s116, 63
    %s118 = scalar_select %p117, %s116, 63
    %s119 = scalar_lea.vmem %s1, %s118
    %v120 = vld [vmem:[%s119] sm:$0x1]
    %v121 = vadd.f32 %v120, %v21
    %122 = vst.msk [vmem:[#allocation4 + $0x2] sm:$0x1] %vm31, %v121
    %s123 = sadd.s32 %s22, 5
    %s124 = sld [smem:[#allocation3 + %s123]]
    %p125 = scmp.gt.s32.totalorder %s124, 0
    %s126 = scalar_select %p125, %s124, 0
    %p127 = scmp.lt.s32.totalorder %s126, 63
    %s128 = scalar_select %p127, %s126, 63
    %s129 = scalar_lea.vmem %s1, %s128
    %v130 = vld [vmem:[%s129] sm:$0x1]
    %v132 = vlaneseq
    %v133 = vshrl.u32 %v132, 7
    %v134 = vsub.s32 0, %v133
    %v135 = vrot.slane %v21, %v134
    %136 = vrot.lane.b32.xlu0 %v135, 96
    %v137 = vpop.permute.xlu0 %136
    %v139 = vadd.f32 %v130, %v137
    %v142 = vunpack.c.l.s4 1983009808
    %v143 = vunpack.c.0.s8 %v142
    %v144 = vlaneseq
    %v145 = vshrl.u32 %v144, 7
    %v146 = vsub.s32 %v143, %v145
    %v147 = vrot.slane %v139, %v146
    %148 = vrot.lane.b32.xlu0 %v147, 32
    %v149 = vpop.permute.xlu0 %148
    %151 = vst.msk [vmem:[#allocation4 + $0x2] sm:$0x1] %vm61, %v149
    %s152 = sadd.s32 %s22, 6
    %s153 = sld [smem:[#allocation3 + %s152]]
    %p154 = scmp.gt.s32.totalorder %s153, 0
    %s155 = scalar_select %p154, %s153, 0
    %p156 = scmp.lt.s32.totalorder %s155, 63
    %s157 = scalar_select %p156, %s155, 63
    %s158 = scalar_lea.vmem %s1, %s157
    %v159 = vld [vmem:[%s158] sm:$0x1]
    %160 = vrot.lane.b32.xlu0 %v135, 64
    %v161 = vpop.permute.xlu0 %160
    %v163 = vadd.f32 %v159, %v161
    %v166 = vunpack.c.l.s4 1983009808
    %v167 = vunpack.c.0.s8 %v166
    %v168 = vlaneseq
    %v169 = vshrl.u32 %v168, 7
    %v170 = vsub.s32 %v167, %v169
    %v171 = vrot.slane %v163, %v170
    %172 = vrot.lane.b32.xlu0 %v171, 64
    %v173 = vpop.permute.xlu0 %172
    %175 = vst.msk [vmem:[#allocation4 + $0x2] sm:$0x1] %vm86, %v173
    %s176 = sadd.s32 %s22, 7
    %s177 = sld [smem:[#allocation3 + %s176]]
    %p178 = scmp.gt.s32.totalorder %s177, 0
    %s179 = scalar_select %p178, %s177, 0
    %p180 = scmp.lt.s32.totalorder %s179, 63
    %s181 = scalar_select %p180, %s179, 63
    %s182 = scalar_lea.vmem %s1, %s181
    %v183 = vld [vmem:[%s182] sm:$0x1]
    %184 = vrot.lane.b32.xlu0 %v135, 32
    %v185 = vpop.permute.xlu0 %184
    %v187 = vadd.f32 %v183, %v185
    %v190 = vunpack.c.l.s4 1983009808
    %v191 = vunpack.c.0.s8 %v190
    %v192 = vlaneseq
    %v193 = vshrl.u32 %v192, 7
    %v194 = vsub.s32 %v191, %v193
    %v195 = vrot.slane %v187, %v194
    %196 = vrot.lane.b32.xlu0 %v195, 96
    %v197 = vpop.permute.xlu0 %196
    %199 = vst.msk [vmem:[#allocation4 + $0x2] sm:$0x1] %vm111, %v197
    %s200 = sadd.s32 %s19, 1
    %s201 = smul.u32 %s200, 128
    %s202 = sld [smem:[#allocation3 + %s201]]
    %p203 = scmp.gt.s32.totalorder %s202, 0
    %s204 = scalar_select %p203, %s202, 0
    %p205 = scmp.lt.s32.totalorder %s204, 63
    %s206 = scalar_select %p205, %s204, 63
    %s207 = scalar_lea.vmem %s1, %s206
    %v208 = vld [vmem:[%s207] sm:$0x1]
    %v209 = vadd.f32 %v208, %v20
    %210 = vst.msk [vmem:[#allocation4 + $0x1] sm:$0x1] %vm31, %v209
    %s211 = sadd.s32 %s201, 1
    %s212 = sld [smem:[#allocation3 + %s211]]
    %p213 = scmp.gt.s32.totalorder %s212, 0
    %s214 = scalar_select %p213, %s212, 0
    %p215 = scmp.lt.s32.totalorder %s214, 63
    %s216 = scalar_select %p215, %s214, 63
    %s217 = scalar_lea.vmem %s1, %s216
    %v218 = vld [vmem:[%s217] sm:$0x1]
    %v219 = vadd.f32 %v218, %v47
    %v222 = vunpack.c.l.s4 1983009808
    %v223 = vunpack.c.0.s8 %v222
    %v224 = vlaneseq
    %v225 = vshrl.u32 %v224, 7
    %v226 = vsub.s32 %v223, %v225
    %v227 = vrot.slane %v219, %v226
    %228 = vrot.lane.b32.xlu0 %v227, 32
    %v229 = vpop.permute.xlu0 %228
    %231 = vst.msk [vmem:[#allocation4 + $0x1] sm:$0x1] %vm61, %v229
    %s232 = sadd.s32 %s201, 2
    %s233 = sld [smem:[#allocation3 + %s232]]
    %p234 = scmp.gt.s32.totalorder %s233, 0
    %s235 = scalar_select %p234, %s233, 0
    %p236 = scmp.lt.s32.totalorder %s235, 63
    %s237 = scalar_select %p236, %s235, 63
    %s238 = scalar_lea.vmem %s1, %s237
    %v239 = vld [vmem:[%s238] sm:$0x1]
    %v240 = vadd.f32 %v239, %v72
    %v243 = vunpack.c.l.s4 1983009808
    %v244 = vunpack.c.0.s8 %v243
    %v245 = vlaneseq
    %v246 = vshrl.u32 %v245, 7
    %v247 = vsub.s32 %v244, %v246
    %v248 = vrot.slane %v240, %v247
    %249 = vrot.lane.b32.xlu0 %v248, 64
    %v250 = vpop.permute.xlu0 %249
    %252 = vst.msk [vmem:[#allocation4 + $0x1] sm:$0x1] %vm86, %v250
    %s253 = sadd.s32 %s201, 3
    %s254 = sld [smem:[#allocation3 + %s253]]
    %p255 = scmp.gt.s32.totalorder %s254, 0
    %s256 = scalar_select %p255, %s254, 0
    %p257 = scmp.lt.s32.totalorder %s256, 63
    %s258 = scalar_select %p257, %s256, 63
    %s259 = scalar_lea.vmem %s1, %s258
    %v260 = vld [vmem:[%s259] sm:$0x1]
    %v261 = vadd.f32 %v260, %v97
    %v264 = vunpack.c.l.s4 1983009808
    %v265 = vunpack.c.0.s8 %v264
    %v266 = vlaneseq
    %v267 = vshrl.u32 %v266, 7
    %v268 = vsub.s32 %v265, %v267
    %v269 = vrot.slane %v261, %v268
    %270 = vrot.lane.b32.xlu0 %v269, 96
    %v271 = vpop.permute.xlu0 %270
    %273 = vst.msk [vmem:[#allocation4 + $0x1] sm:$0x1] %vm111, %v271
    %s274 = sadd.s32 %s201, 4
    %s275 = sld [smem:[#allocation3 + %s274]]
    %p276 = scmp.gt.s32.totalorder %s275, 0
    %s277 = scalar_select %p276, %s275, 0
    %p278 = scmp.lt.s32.totalorder %s277, 63
    %s279 = scalar_select %p278, %s277, 63
    %s280 = scalar_lea.vmem %s1, %s279
    %v281 = vld [vmem:[%s280] sm:$0x1]
    %v282 = vadd.f32 %v281, %v21
    %283 = vst.msk [vmem:[#allocation4 + $0x3] sm:$0x1] %vm31, %v282
    %s284 = sadd.s32 %s201, 5
    %s285 = sld [smem:[#allocation3 + %s284]]
    %p286 = scmp.gt.s32.totalorder %s285, 0
    %s287 = scalar_select %p286, %s285, 0
    %p288 = scmp.lt.s32.totalorder %s287, 63
    %s289 = scalar_select %p288, %s287, 63
    %s290 = scalar_lea.vmem %s1, %s289
    %v291 = vld [vmem:[%s290] sm:$0x1]
    %v292 = vadd.f32 %v291, %v137
    %v295 = vunpack.c.l.s4 1983009808
    %v296 = vunpack.c.0.s8 %v295
    %v297 = vlaneseq
    %v298 = vshrl.u32 %v297, 7
    %v299 = vsub.s32 %v296, %v298
    %v300 = vrot.slane %v292, %v299
    %301 = vrot.lane.b32.xlu0 %v300, 32
    %v302 = vpop.permute.xlu0 %301
    %304 = vst.msk [vmem:[#allocation4 + $0x3] sm:$0x1] %vm61, %v302
    %s305 = sadd.s32 %s201, 6
    %s306 = sld [smem:[#allocation3 + %s305]]
    %p307 = scmp.gt.s32.totalorder %s306, 0
    %s308 = scalar_select %p307, %s306, 0
    %p309 = scmp.lt.s32.totalorder %s308, 63
    %s310 = scalar_select %p309, %s308, 63
    %s311 = scalar_lea.vmem %s1, %s310
    %v312 = vld [vmem:[%s311] sm:$0x1]
    %v313 = vadd.f32 %v312, %v161
    %v316 = vunpack.c.l.s4 1983009808
    %v317 = vunpack.c.0.s8 %v316
    %v318 = vlaneseq
    %v319 = vshrl.u32 %v318, 7
    %v320 = vsub.s32 %v317, %v319
    %v321 = vrot.slane %v313, %v320
    %322 = vrot.lane.b32.xlu0 %v321, 64
    %v323 = vpop.permute.xlu0 %322
    %325 = vst.msk [vmem:[#allocation4 + $0x3] sm:$0x1] %vm86, %v323
    %s326 = sadd.s32 %s201, 7
    %s327 = sld [smem:[#allocation3 + %s326]]
    %p328 = scmp.gt.s32.totalorder %s327, 0
    %s329 = scalar_select %p328, %s327, 0
    %p330 = scmp.lt.s32.totalorder %s329, 63
    %s331 = scalar_select %p330, %s329, 63
    %s332 = scalar_lea.vmem %s1, %s331
    %v333 = vld [vmem:[%s332] sm:$0x1]
    %v334 = vadd.f32 %v333, %v185
    %v337 = vunpack.c.l.s4 1983009808
    %v338 = vunpack.c.0.s8 %v337
    %v339 = vlaneseq
    %v340 = vshrl.u32 %v339, 7
    %v341 = vsub.s32 %v338, %v340
    %v342 = vrot.slane %v334, %v341
    %343 = vrot.lane.b32.xlu0 %v342, 96
    %v344 = vpop.permute.xlu0 %343
    %346 = vst.msk [vmem:[#allocation4 + $0x3] sm:$0x1] %vm111, %v344
    // Predicated region
    $region10: #{tpu_custom_call.1} parent=1 // pred_check
      _
    $region11: #{tpu_custom_call.1} parent=1 // pred_check_branch
      %348 = sbr.rel (0) target = $region13
    $region12: #{tpu_custom_call.1} parent=1 // pred_region
      %s350 = ssub.s32 64, 64
      %351 = vsyncadd [#allocation5], %s350
      %s353 = sshll.u32 [#allocation4], 4
      %s354 = int_to_ptr.vmem [resolvable:$true] %s353
      %356 = dma.vmem_to_hbm [thread:$0]  %s354, 64, %s3, [#allocation5]
    $region13: #{tpu_custom_call.1} parent=1 // pred_fallthru
      _
    // Predicated region
    $region14: #{tpu_custom_call.1} parent=1 // pred_check
      _
    $region15: #{tpu_custom_call.1} parent=1 // pred_check_branch
      %358 = sbr.rel (0) target = $region17
    $region16: #{tpu_custom_call.1} parent=1 // pred_region
      %359 = dma.done [#allocation5], 64
    $region17: #{tpu_custom_call.1} parent=1 // pred_fallthru
      _
    %360 = vsyncpa [#allocation5], 1

</llo_original>
